<compile_context>
chip_gen: v5e
topology: v5e:2x2
jax: 0.10.0
libtpu: 0.0.40
codegen_flags: <defaults>
</compile_context>

<pallas_src>
import functools

import jax
import jax.numpy as jnp
import numpy as np
from jax.experimental import pallas as pl
from jax.experimental.pallas import tpu as pltpu

K = 3              # 3x3 convs
LEAKY_SLOPE = 0.2  # nn.LeakyReLU(0.2)


def _banded_weights(w_oihw, W, d):
    """Fold one 3x3 conv (OIHW weights, horizontal padding=d, dilation=d) into K
    block-banded matrices acting on a (W, Cin) -> W*Cin lane-folded image row.

    big[ky, p*Cin + ci, x*Cout + co] = w[co, ci, ky, kx]   with p = x + (kx-1)*d ;
    taps whose source pixel p falls into the zero padding are simply absent, so the
    horizontal padding never has to be materialized.
    Returns (K, W*Cin, W*Cout) float32.
    """
    Cout, Cin, Kh, Kw = w_oihw.shape
    sel = np.zeros((Kw, W, W), np.float32)          # sel[kx, p, x]
    for kx in range(Kw):
        for x in range(W):
            p = x + (kx - 1) * d
            if 0 <= p < W:
                sel[kx, p, x] = 1.0
    w_k = jnp.transpose(w_oihw, (2, 3, 1, 0))       # (ky, kx, ci, co)
    big = jnp.einsum('kpx,ykio->ypixo', jnp.asarray(sel), w_k,
                     precision=jax.lax.Precision.HIGHEST)   # (ky, p, ci, x, co)
    return big.reshape(Kh, W * Cin, W * Cout)


def _make_kernel(H, W, C, d):
    Wf = W * C

    def _shift_rows(v, s):
        # result[y, :] = v[y + s, :] for 0 <= y + s < H, zero rows otherwise.
        if s == 0:
            return v
        z = jnp.zeros((abs(s), Wf), v.dtype)
        if s > 0:
            return jnp.concatenate([v[s:, :], z], axis=0)
        return jnp.concatenate([z, v[:H + s, :]], axis=0)

    def _conv3x3(v, wbank_ref, s):
        # v: (H, W*C) f32 ; wbank_ref: (3, W*C, W*C) bf16 banded weights ; s: row stride.
        def mm(slab, ky):
            return jnp.dot(slab.astype(jnp.bfloat16), wbank_ref[ky],
                           preferred_element_type=jnp.float32)
        acc = mm(_shift_rows(v, -s), 0)          # ky = 0  -> input row y - s
        acc = acc + mm(v, 1)                     # ky = 1  -> input row y
        acc = acc + mm(_shift_rows(v, s), 2)     # ky = 2  -> input row y + s
        return acc                               # (H, W*C) f32

    def kernel(x_ref, w1_ref, w2_ref, b2_ref, o_ref):
        # x_ref : (H, W*C) f32   one NHWC image with (W, C) folded into the lane axis
        # w1_ref: (3, W*C, W*C) bf16   conv1 banded weights (padding=d, dilation=d)
        # w2_ref: (3, W*C, W*C) bf16   conv2 banded weights (padding=1)
        # b2_ref: (1, W*C) f32         conv2 bias, tiled across W
        # o_ref : (H, W*C) f32
        x = x_ref[...]                                            # f32; also the residual

        # ---- conv1 (dilation d, padding d, NO bias) + LeakyReLU(0.2) ----
        acc1 = _conv3x3(x, w1_ref, d)
        act = jnp.where(acc1 > 0, acc1, LEAKY_SLOPE * acc1)

        # ---- conv2 (padding 1, with bias) + residual add ----
        acc2 = _conv3x3(act, w2_ref, 1)
        o_ref[...] = (acc2 + b2_ref[...] + x).astype(o_ref.dtype)

    return kernel


@functools.partial(jax.jit, static_argnames=("dilation",))
def adaptive_dilated_block(x_nchw, w1_oihw, w2_oihw, b2, dilation=1):
    """x_nchw: (N, C, H, W) f32.  Returns (N, C, H, W)."""
    N, C, H, W = x_nchw.shape
    d = int(dilation)
    Wf = W * C

    # NCHW -> NHWC, then fold (W, C) into the lane axis (free contiguous reshape).
    x2d = jnp.transpose(x_nchw, (0, 2, 3, 1)).reshape(N, H, Wf)

    # Conv weights as per-ky block-banded matrices over the folded row (bf16 MXU operands;
    # accumulation stays f32 inside the kernel via preferred_element_type).
    w1b = _banded_weights(w1_oihw, W, d).astype(jnp.bfloat16)   # (3, W*C, W*C)
    w2b = _banded_weights(w2_oihw, W, 1).astype(jnp.bfloat16)   # (3, W*C, W*C)
    b2row = jnp.tile(b2.astype(jnp.float32), W).reshape(1, Wf)

    # Advisory cost hint for the XLA scheduler (actual banded-matmul flops).
    flops = N * 2 * K * 2 * H * Wf * Wf
    bytes_accessed = 2 * x2d.size * 4 + (w1b.size + w2b.size) * 2 + b2row.size * 4

    out2d = pl.pallas_call(
        _make_kernel(H, W, C, d),
        out_shape=jax.ShapeDtypeStruct((N, H, Wf), x_nchw.dtype),
        grid_spec=pltpu.PrefetchScalarGridSpec(
            num_scalar_prefetch=0,
            grid=(N,),
            in_specs=[
                pl.BlockSpec((None, H, Wf), lambda b: (b, 0, 0)),
                pl.BlockSpec((K, Wf, Wf), lambda b: (0, 0, 0)),
                pl.BlockSpec((K, Wf, Wf), lambda b: (0, 0, 0)),
                pl.BlockSpec((1, Wf), lambda b: (0, 0)),
            ],
            out_specs=pl.BlockSpec((None, H, Wf), lambda b: (b, 0, 0)),
        ),
        compiler_params=pltpu.CompilerParams(
            dimension_semantics=("parallel",),          # batch images are independent
        ),
        cost_estimate=pl.CostEstimate(
            flops=flops, transcendentals=0, bytes_accessed=bytes_accessed),
    )(x2d, w1b, w2b, b2row)

    return jnp.transpose(out2d.reshape(N, H, W, C), (0, 3, 1, 2))


def _reference(x, w1, w2, b2, dilation=1, mixed=False):
    """Pure-JAX NCHW reference mirroring the PyTorch forward.

    mixed=True mirrors the kernel's precision policy (bf16 matmul operands,
    f32 accumulation, f32 elementwise) for a tight apples-to-apples check.
    """
    dn = ('NCHW', 'OIHW', 'NCHW')
    d = int(dilation)

    def conv(inp, w, pad, dil):
        if mixed:
            inp = inp.astype(jnp.bfloat16)
            w = w.astype(jnp.bfloat16)
        return jax.lax.conv_general_dilated(
            inp, w, (1, 1), ((pad, pad), (pad, pad)),
            rhs_dilation=(dil, dil), dimension_numbers=dn,
            preferred_element_type=jnp.float32)

    out = conv(x, w1, d, d)
    out = jnp.where(out > 0, out, LEAKY_SLOPE * out)
    out = conv(out, w2, 1, 1) + b2.reshape(1, -1, 1, 1)
    return out + x


if __name__ == "__main__":
    key = jax.random.PRNGKey(0)
    N, C, H, W = 2, 4, 16, 16
    k1, k2, k3, k4 = jax.random.split(key, 4)

    x = jax.random.normal(k1, (N, C, H, W), jnp.float32)

    # Deterministic parameter init (PyTorch-Conv2d-style uniform bound).
    fan_in = C * K * K
    bound = 1.0 / np.sqrt(fan_in)
    w1 = jax.random.uniform(k2, (C, C, K, K), jnp.float32, -bound, bound)
    w2 = jax.random.uniform(k3, (C, C, K, K), jnp.float32, -bound, bound)
    b2 = jax.random.uniform(k4, (C,), jnp.float32, -bound, bound)
    # conv1's bias exists in __init__ (Bias=True) but is NOT used in forward.

    out = adaptive_dilated_block(x, w1, w2, b2, dilation=1)
    out = jax.block_until_ready(out)
    out_np = np.asarray(out)

    # Tight check against a reference that mirrors the kernel's mixed-precision policy.
    ref_mixed = np.asarray(_reference(x, w1, w2, b2, dilation=1, mixed=True))
    np.testing.assert_allclose(out_np, ref_mixed, rtol=5e-3, atol=5e-3)

    # Sanity check against strict-f32 PyTorch semantics (bf16-operand-level tolerance).
    ref_f32 = np.asarray(_reference(x, w1, w2, b2, dilation=1, mixed=False))
    np.testing.assert_allclose(out_np, ref_f32, rtol=3e-2, atol=3e-2)

    print("KERNEL_OK")
</pallas_src>

<mosaic_0001>
module attributes {stable_mosaic.version = 11 : i64} {
  func.func @kernel(%arg0: i32, %arg1: memref<1x16x64xf32, #tpu.memory_space<vmem>>, %arg2: memref<3x64x64xbf16, #tpu.memory_space<vmem>>, %arg3: memref<3x64x64xbf16, #tpu.memory_space<vmem>>, %arg4: memref<1x64xf32, #tpu.memory_space<vmem>>, %arg5: memref<1x16x64xf32, #tpu.memory_space<vmem>>) attributes {dimension_semantics = [#tpu.dimension_semantics<parallel>], iteration_bounds = array<i64: 2>, scalar_prefetch = 0 : i64, scratch_operands = 0 : i64, tpu.core_type = #tpu.core_type<tc>, window_params = [{transform_indices = @transform_0, window_bounds = array<i64: 1, 16, 64>}, {pipeline_mode = #tpu.pipeline_mode<synchronous>, transform_indices = @transform_1, window_bounds = array<i64: 3, 64, 64>}, {pipeline_mode = #tpu.pipeline_mode<synchronous>, transform_indices = @transform_2, window_bounds = array<i64: 3, 64, 64>}, {pipeline_mode = #tpu.pipeline_mode<synchronous>, transform_indices = @transform_3, window_bounds = array<i64: 1, 64>}, {transform_indices = @transform_4, window_bounds = array<i64: 1, 16, 64>}]} {
    %c0 = arith.constant 0 : index
    %c0_0 = arith.constant 0 : index
    %c0_1 = arith.constant 0 : index
    %0 = vector.load %arg1[%c0, %c0_0, %c0_1] : memref<1x16x64xf32, #tpu.memory_space<vmem>>, vector<1x16x64xf32>
    %1 = vector.shape_cast %0 : vector<1x16x64xf32> to vector<16x64xf32>
    %cst = arith.constant 0.000000e+00 : f32
    %2 = vector.broadcast %cst : f32 to vector<1x64xf32>
    %3 = vector.extract_strided_slice %1 {offsets = [0, 0], sizes = [15, 64], strides = [1, 1]} : vector<16x64xf32> to vector<15x64xf32>
    %4 = tpu.concatenate %2, %3 in 0 : vector<1x64xf32>, vector<15x64xf32> -> vector<16x64xf32>
    %5 = arith.truncf %4 : vector<16x64xf32> to vector<16x64xbf16>
    %c0_2 = arith.constant 0 : index
    %c0_3 = arith.constant 0 : index
    %c0_4 = arith.constant 0 : index
    %6 = vector.load %arg2[%c0_2, %c0_3, %c0_4] : memref<3x64x64xbf16, #tpu.memory_space<vmem>>, vector<1x64x64xbf16>
    %7 = vector.shape_cast %6 : vector<1x64x64xbf16> to vector<64x64xbf16>
    %cst_5 = arith.constant dense<0.000000e+00> : vector<16x64xf32>
    %8 = tpu.matmul %5, %7, %cst_5 {dimension_numbers = #tpu.dot_dimension_numbers<[1], [0], [0], [1], [0, 0, 1, 1], [], []>} : vector<16x64xbf16>, vector<64x64xbf16>, vector<16x64xf32> -> vector<16x64xf32>
    %9 = arith.truncf %1 : vector<16x64xf32> to vector<16x64xbf16>
    %c1 = arith.constant 1 : index
    %c0_6 = arith.constant 0 : index
    %c0_7 = arith.constant 0 : index
    %10 = vector.load %arg2[%c1, %c0_6, %c0_7] : memref<3x64x64xbf16, #tpu.memory_space<vmem>>, vector<1x64x64xbf16>
    %11 = vector.shape_cast %10 : vector<1x64x64xbf16> to vector<64x64xbf16>
    %cst_8 = arith.constant dense<0.000000e+00> : vector<16x64xf32>
    %12 = tpu.matmul %9, %11, %cst_8 {dimension_numbers = #tpu.dot_dimension_numbers<[1], [0], [0], [1], [0, 0, 1, 1], [], []>} : vector<16x64xbf16>, vector<64x64xbf16>, vector<16x64xf32> -> vector<16x64xf32>
    %13 = arith.addf %8, %12 : vector<16x64xf32>
    %cst_9 = arith.constant 0.000000e+00 : f32
    %14 = vector.broadcast %cst_9 : f32 to vector<1x64xf32>
    %15 = vector.extract_strided_slice %1 {offsets = [1, 0], sizes = [15, 64], strides = [1, 1]} : vector<16x64xf32> to vector<15x64xf32>
    %16 = tpu.concatenate %15, %14 in 0 : vector<15x64xf32>, vector<1x64xf32> -> vector<16x64xf32>
    %17 = arith.truncf %16 : vector<16x64xf32> to vector<16x64xbf16>
    %c2 = arith.constant 2 : index
    %c0_10 = arith.constant 0 : index
    %c0_11 = arith.constant 0 : index
    %18 = vector.load %arg2[%c2, %c0_10, %c0_11] : memref<3x64x64xbf16, #tpu.memory_space<vmem>>, vector<1x64x64xbf16>
    %19 = vector.shape_cast %18 : vector<1x64x64xbf16> to vector<64x64xbf16>
    %cst_12 = arith.constant dense<0.000000e+00> : vector<16x64xf32>
    %20 = tpu.matmul %17, %19, %cst_12 {dimension_numbers = #tpu.dot_dimension_numbers<[1], [0], [0], [1], [0, 0, 1, 1], [], []>} : vector<16x64xbf16>, vector<64x64xbf16>, vector<16x64xf32> -> vector<16x64xf32>
    %21 = arith.addf %13, %20 : vector<16x64xf32>
    %cst_13 = arith.constant 0.000000e+00 : f32
    %22 = vector.broadcast %cst_13 : f32 to vector<16x64xf32>
    %23 = arith.cmpf ogt, %21, %22 : vector<16x64xf32>
    %cst_14 = arith.constant 2.000000e-01 : f32
    %24 = vector.broadcast %cst_14 : f32 to vector<16x64xf32>
    %25 = arith.mulf %24, %21 : vector<16x64xf32>
    %26 = arith.select %23, %21, %25 : vector<16x64xi1>, vector<16x64xf32>
    %cst_15 = arith.constant 0.000000e+00 : f32
    %27 = vector.broadcast %cst_15 : f32 to vector<1x64xf32>
    %28 = vector.extract_strided_slice %26 {offsets = [0, 0], sizes = [15, 64], strides = [1, 1]} : vector<16x64xf32> to vector<15x64xf32>
    %29 = tpu.concatenate %27, %28 in 0 : vector<1x64xf32>, vector<15x64xf32> -> vector<16x64xf32>
    %30 = arith.truncf %29 : vector<16x64xf32> to vector<16x64xbf16>
    %c0_16 = arith.constant 0 : index
    %c0_17 = arith.constant 0 : index
    %c0_18 = arith.constant 0 : index
    %31 = vector.load %arg3[%c0_16, %c0_17, %c0_18] : memref<3x64x64xbf16, #tpu.memory_space<vmem>>, vector<1x64x64xbf16>
    %32 = vector.shape_cast %31 : vector<1x64x64xbf16> to vector<64x64xbf16>
    %cst_19 = arith.constant dense<0.000000e+00> : vector<16x64xf32>
    %33 = tpu.matmul %30, %32, %cst_19 {dimension_numbers = #tpu.dot_dimension_numbers<[1], [0], [0], [1], [0, 0, 1, 1], [], []>} : vector<16x64xbf16>, vector<64x64xbf16>, vector<16x64xf32> -> vector<16x64xf32>
    %34 = arith.truncf %26 : vector<16x64xf32> to vector<16x64xbf16>
    %c1_20 = arith.constant 1 : index
    %c0_21 = arith.constant 0 : index
    %c0_22 = arith.constant 0 : index
    %35 = vector.load %arg3[%c1_20, %c0_21, %c0_22] : memref<3x64x64xbf16, #tpu.memory_space<vmem>>, vector<1x64x64xbf16>
    %36 = vector.shape_cast %35 : vector<1x64x64xbf16> to vector<64x64xbf16>
    %cst_23 = arith.constant dense<0.000000e+00> : vector<16x64xf32>
    %37 = tpu.matmul %34, %36, %cst_23 {dimension_numbers = #tpu.dot_dimension_numbers<[1], [0], [0], [1], [0, 0, 1, 1], [], []>} : vector<16x64xbf16>, vector<64x64xbf16>, vector<16x64xf32> -> vector<16x64xf32>
    %38 = arith.addf %33, %37 : vector<16x64xf32>
    %cst_24 = arith.constant 0.000000e+00 : f32
    %39 = vector.broadcast %cst_24 : f32 to vector<1x64xf32>
    %40 = vector.extract_strided_slice %26 {offsets = [1, 0], sizes = [15, 64], strides = [1, 1]} : vector<16x64xf32> to vector<15x64xf32>
    %41 = tpu.concatenate %40, %39 in 0 : vector<15x64xf32>, vector<1x64xf32> -> vector<16x64xf32>
    %42 = arith.truncf %41 : vector<16x64xf32> to vector<16x64xbf16>
    %c2_25 = arith.constant 2 : index
    %c0_26 = arith.constant 0 : index
    %c0_27 = arith.constant 0 : index
    %43 = vector.load %arg3[%c2_25, %c0_26, %c0_27] : memref<3x64x64xbf16, #tpu.memory_space<vmem>>, vector<1x64x64xbf16>
    %44 = vector.shape_cast %43 : vector<1x64x64xbf16> to vector<64x64xbf16>
    %cst_28 = arith.constant dense<0.000000e+00> : vector<16x64xf32>
    %45 = tpu.matmul %42, %44, %cst_28 {dimension_numbers = #tpu.dot_dimension_numbers<[1], [0], [0], [1], [0, 0, 1, 1], [], []>} : vector<16x64xbf16>, vector<64x64xbf16>, vector<16x64xf32> -> vector<16x64xf32>
    %46 = arith.addf %38, %45 : vector<16x64xf32>
    %c0_29 = arith.constant 0 : index
    %c0_30 = arith.constant 0 : index
    %47 = vector.load %arg4[%c0_29, %c0_30] : memref<1x64xf32, #tpu.memory_space<vmem>>, vector<1x64xf32>
    %48 = vector.broadcast %47 : vector<1x64xf32> to vector<16x64xf32>
    %49 = arith.addf %46, %48 : vector<16x64xf32>
    %50 = arith.addf %49, %1 : vector<16x64xf32>
    %c0_31 = arith.constant 0 : index
    %c0_32 = arith.constant 0 : index
    %c0_33 = arith.constant 0 : index
    %51 = vector.load %arg5[%c0_31, %c0_32, %c0_33] : memref<1x16x64xf32, #tpu.memory_space<vmem>>, vector<1x16x64xf32>
    %52 = vector.shape_cast %51 : vector<1x16x64xf32> to vector<16x64xf32>
    %53 = vector.shape_cast %50 : vector<16x64xf32> to vector<1x16x64xf32>
    tpu.vector_store %arg5[%c0_31, %c0_32, %c0_33], %53 {strides = array<i32>} : memref<1x16x64xf32, #tpu.memory_space<vmem>>, vector<1x16x64xf32>,
    return
  }
  func.func @transform_0(%arg0: i32) -> (i32, i32, i32) {
    %c0_i32 = arith.constant 0 : i32
    %c0_i32_0 = arith.constant 0 : i32
    %c0_i32_1 = arith.constant 0 : i32
    return %arg0, %c0_i32, %c0_i32_0 : i32, i32, i32
  }
  func.func @transform_1(%arg0: i32) -> (i32, i32, i32) {
    %c0_i32 = arith.constant 0 : i32
    %c0_i32_0 = arith.constant 0 : i32
    %c0_i32_1 = arith.constant 0 : i32
    %c0_i32_2 = arith.constant 0 : i32
    return %c0_i32, %c0_i32_0, %c0_i32_1 : i32, i32, i32
  }
  func.func @transform_2(%arg0: i32) -> (i32, i32, i32) {
    %c0_i32 = arith.constant 0 : i32
    %c0_i32_0 = arith.constant 0 : i32
    %c0_i32_1 = arith.constant 0 : i32
    %c0_i32_2 = arith.constant 0 : i32
    return %c0_i32, %c0_i32_0, %c0_i32_1 : i32, i32, i32
  }
  func.func @transform_3(%arg0: i32) -> (i32, i32) {
    %c0_i32 = arith.constant 0 : i32
    %c0_i32_0 = arith.constant 0 : i32
    %c0_i32_1 = arith.constant 0 : i32
    return %c0_i32, %c0_i32_0 : i32, i32
  }
  func.func @transform_4(%arg0: i32) -> (i32, i32, i32) {
    %c0_i32 = arith.constant 0 : i32
    %c0_i32_0 = arith.constant 0 : i32
    %c0_i32_1 = arith.constant 0 : i32
    return %arg0, %c0_i32, %c0_i32_0 : i32, i32, i32
  }
}

</mosaic_0001>

<llo_original>
// kernel: tile.8
$region0: #{tile.8}
  #allocation0 [shape = 's32[1]{0}', space=sflag, size = 0x4, scoped, tag = 'scoped memory for tile.8']
  %s0 = inlined_call_operand.vmem [shape: f32[4], index: 0, kind: input, shape index: {}]
  %s1 = inlined_call_operand.vmem [shape: f32[16,4], index: 1, kind: output, shape index: {}]
  // Predicated region
  $region2: #{tile.8} parent=0 // pred_check
    _
  $region3: #{tile.8} parent=0 // pred_check_branch
    %3 = sbr.rel (0) target = $region5
  $region4: #{tile.8} parent=0 // pred_region
    _
  $region5: #{tile.8} parent=0 // pred_fallthru
    _
  %v4 = vld [vmem:[%s0] ss:$0 sm:$0xff]
  %5 = vst [vmem:[%s1] sm:$0xff] %v4
  %s6 = scalar_lea.vmem %s1, 8
  %7 = vst [vmem:[%s6] sm:$0xff] %v4

// kernel: tile.9
$region0: #{tile.9}
  %s0 = inlined_call_operand.vmem [shape: f32[16,4], index: 0, kind: input, shape index: {}]
  %s1 = inlined_call_operand.vmem [shape: f32[1,64], index: 1, kind: output, shape index: {}]
  $region1: #{tile.9} parent=0
    #allocation0 [shape = 'u8[4096]{0}', space=vmem, size = 0x1000, scoped, tag = 'scoped mem for output reshape']
    %v2 = vld [vmem:[%s0] sm:$0x1]
    %vm3 = vcmask 31744
    %4 = vst.msk [vmem:[#allocation0] sm:$0x1] %vm3, %v2
    %s5 = scalar_lea.vmem %s0, 15
    %v6 = vld [vmem:[%s5] sm:$0x1]
    %7 = vrot.lane.b32.xlu0 %v6, 60
    %v8 = vpop.permute.xlu0 %7
    %vm9 = vcmask 523744
    %10 = vst.msk [vmem:[#allocation0] sm:$0x1] %vm9, %v8
    %s11 = scalar_lea.vmem %s0, 14
    %v12 = vld [vmem:[%s11] sm:$0x1]
    %13 = vrot.lane.b32.xlu0 %v12, 56
    %v14 = vpop.permute.xlu0 %13
    %vm15 = vcmask 490944
    %16 = vst.msk [vmem:[#allocation0] sm:$0x1] %vm15, %v14
    %s17 = scalar_lea.vmem %s0, 13
    %v18 = vld [vmem:[%s17] sm:$0x1]
    %19 = vrot.lane.b32.xlu0 %v18, 52
    %v20 = vpop.permute.xlu0 %19
    %vm21 = vcmask 458144
    %22 = vst.msk [vmem:[#allocation0] sm:$0x1] %vm21, %v20
    %s23 = scalar_lea.vmem %s0, 12
    %v24 = vld [vmem:[%s23] sm:$0x1]
    %25 = vrot.lane.b32.xlu0 %v24, 48
    %v26 = vpop.permute.xlu0 %25
    %vm27 = vcmask 425344
    %28 = vst.msk [vmem:[#allocation0] sm:$0x1] %vm27, %v26
    %s29 = scalar_lea.vmem %s0, 11
    %v30 = vld [vmem:[%s29] sm:$0x1]
    %31 = vrot.lane.b32.xlu0 %v30, 44
    %v32 = vpop.permute.xlu0 %31
    %vm33 = vcmask 392544
    %34 = vst.msk [vmem:[#allocation0] sm:$0x1] %vm33, %v32
    %s35 = scalar_lea.vmem %s0, 10
    %v36 = vld [vmem:[%s35] sm:$0x1]
    %37 = vrot.lane.b32.xlu0 %v36, 40
    %v38 = vpop.permute.xlu0 %37
    %vm39 = vcmask 359744
    %40 = vst.msk [vmem:[#allocation0] sm:$0x1] %vm39, %v38
    %s41 = scalar_lea.vmem %s0, 9
    %v42 = vld [vmem:[%s41] sm:$0x1]
    %43 = vrot.lane.b32.xlu0 %v42, 36
    %v44 = vpop.permute.xlu0 %43
    %vm45 = vcmask 326944
    %46 = vst.msk [vmem:[#allocation0] sm:$0x1] %vm45, %v44
    %s47 = scalar_lea.vmem %s0, 8
    %v48 = vld [vmem:[%s47] sm:$0x1]
    %49 = vrot.lane.b32.xlu0 %v48, 32
    %v50 = vpop.permute.xlu0 %49
    %vm51 = vcmask 294144
    %52 = vst.msk [vmem:[#allocation0] sm:$0x1] %vm51, %v50
    %s53 = scalar_lea.vmem %s0, 7
    %v54 = vld [vmem:[%s53] sm:$0x1]
    %55 = vrot.lane.b32.xlu0 %v54, 28
    %v56 = vpop.permute.xlu0 %55
    %vm57 = vcmask 261344
    %58 = vst.msk [vmem:[#allocation0] sm:$0x1] %vm57, %v56
    %s59 = scalar_lea.vmem %s0, 6
    %v60 = vld [vmem:[%s59] sm:$0x1]
    %61 = vrot.lane.b32.xlu0 %v60, 24
    %v62 = vpop.permute.xlu0 %61
    %vm63 = vcmask 228544
    %64 = vst.msk [vmem:[#allocation0] sm:$0x1] %vm63, %v62
    %s65 = scalar_lea.vmem %s0, 5
    %v66 = vld [vmem:[%s65] sm:$0x1]
    %67 = vrot.lane.b32.xlu0 %v66, 20
    %v68 = vpop.permute.xlu0 %67
    %vm69 = vcmask 195744
    %70 = vst.msk [vmem:[#allocation0] sm:$0x1] %vm69, %v68
    %s71 = scalar_lea.vmem %s0, 4
    %v72 = vld [vmem:[%s71] sm:$0x1]
    %73 = vrot.lane.b32.xlu0 %v72, 16
    %v74 = vpop.permute.xlu0 %73
    %vm75 = vcmask 162944
    %76 = vst.msk [vmem:[#allocation0] sm:$0x1] %vm75, %v74
    %s77 = scalar_lea.vmem %s0, 3
    %v78 = vld [vmem:[%s77] sm:$0x1]
    %79 = vrot.lane.b32.xlu0 %v78, 12
    %v80 = vpop.permute.xlu0 %79
    %vm81 = vcmask 130144
    %82 = vst.msk [vmem:[#allocation0] sm:$0x1] %vm81, %v80
    %s83 = scalar_lea.vmem %s0, 2
    %v84 = vld [vmem:[%s83] sm:$0x1]
    %85 = vrot.lane.b32.xlu0 %v84, 8
    %v86 = vpop.permute.xlu0 %85
    %vm87 = vcmask 97344
    %88 = vst.msk [vmem:[#allocation0] sm:$0x1] %vm87, %v86
    %s89 = scalar_lea.vmem %s0, 1
    %v90 = vld [vmem:[%s89] sm:$0x1]
    %91 = vrot.lane.b32.xlu0 %v90, 4
    %v92 = vpop.permute.xlu0 %91
    %vm93 = vcmask 64544
    %94 = vst.msk [vmem:[#allocation0] sm:$0x1] %vm93, %v92
    %s96 = ssub.s32 2, 1
    %v97 = vld [vmem:[#allocation0] sm:%s96]
    %s99 = ssub.s32 2, 1
    %100 = vst [vmem:[%s1] sm:%s99] %v97

// kernel: adaptive_dilated_block.1
$region0: #{adaptive_dilated_block.1}
  #allocation0 [shape = 'u32[]', space=smem, size = 0x4, offset = 0x4, fixed_abs, tag = 'smem constant byte address 0x4 - core index']
  #allocation1 [shape = 'u32[72,128]{1,0:T(1,128)}', space=vmem, size = 0x9000, scoped, tag = 'internal scratch']
  %s0 = inlined_call_operand.vmem [shape: f32[2,16,64], index: 0, kind: input, shape index: {}]
  %s1 = inlined_call_operand.vmem [shape: bf16[3,64,64], index: 1, kind: input, shape index: {}]
  %s2 = inlined_call_operand.vmem [shape: bf16[3,64,64], index: 2, kind: input, shape index: {}]
  %s3 = inlined_call_operand.vmem [shape: f32[1,64], index: 3, kind: input, shape index: {}]
  %s4 = inlined_call_operand.vmem [shape: f32[2,16,64], index: 4, kind: output, shape index: {}]
  %s5 = sld [smem:[#allocation0]]
  $region49: #{adaptive_dilated_block.1} parent=0
    _
  %s7 = ssub.s32 1, %s5
  %s8 = scalar_select 0, %s7, %s5
  loop: start=0, step=1, limit=4
  $region2: #{adaptive_dilated_block.1} parent=0 // loop_pre_header
    _
  $region3: #{adaptive_dilated_block.1} parent=0 // loop_header
    %s10 = sphi 0, %s14
    %p11 = scmp.ge.s32.totalorder %s10, 4
    %s20 = sphi 0, %s22
    %s23 = sphi 0, %s20
    %s24 = sphi 0, %s23
    %s40 = sphi 0, %s24
    %s44 = sphi 0, %s44
    %s46 = sphi 0, %s44
    %s47 = sphi 0, %s46
    %s61 = sphi 0, %s47
    %s65 = sphi 0, %s65
    %s67 = sphi 0, %s65
    %s68 = sphi 0, %s67
    %s82 = sphi 0, %s68
    %s86 = sphi 0, %s86
    %s88 = sphi 0, %s86
    %s89 = sphi 0, %s88
    %s103 = sphi 0, %s89
    %s109 = sphi 0, %s111
    %s112 = sphi 0, %s109
    %s113 = sphi 0, %s112
    %s129 = sphi 0, %s113
  $region4: #{adaptive_dilated_block.1} parent=0 // loop_header_branch
    %13 = sbr.rel (%p11) target = $region8
  $region5: #{adaptive_dilated_block.1} parent=0 // loop_body
    %s15 = ssub.s32 %s10, 1
    %s16 = ssub.s32 %s10, 2
    %s17 = sadd.s32 %s10, 1
    %s18 = ssub.s32 %s10, %s17
    %p19 = scmp.eq.s32.totalorder %s18, 0
    %s21 = sadd.s32 %s20, 1
    %s22 = scalar_select %p19, %s20, %s21
    %p25 = pneg %p19
    %p26 = scmp.eq.s32.totalorder %s10, 1
    %p27 = por %p25, %p26
    %p28 = scmp.ne.s32.totalorder %s20, %s23
    %p29 = scmp.eq.s32.totalorder %s10, 0
    %p30 = por %p28, %p29
    %p31 = scmp.ne.s32.totalorder %s20, %s23
    %p32 = scmp.eq.s32.totalorder %s15, 1
    %p33 = por %p31, %p32
    %p34 = scmp.ne.s32.totalorder %s23, %s24
    %p35 = scmp.eq.s32.totalorder %s15, 0
    %p36 = por %p34, %p35
    %p37 = scmp.ne.s32.totalorder %s23, %s24
    %p38 = scmp.eq.s32.totalorder %s16, 1
    %p39 = por %p37, %p38
    %p41 = scmp.ne.s32.totalorder %s24, %s40
    %p42 = scmp.eq.s32.totalorder %s16, 0
    %p43 = por %p41, %p42
    %s45 = sadd.s32 %s44, 1
    %p48 = scmp.eq.s32.totalorder %s10, 1
    %p49 = scmp.ne.s32.totalorder %s44, %s46
    %p50 = scmp.eq.s32.totalorder %s10, 0
    %p51 = por %p49, %p50
    %p52 = scmp.ne.s32.totalorder %s44, %s46
    %p53 = scmp.eq.s32.totalorder %s15, 1
    %p54 = por %p52, %p53
    %p55 = scmp.ne.s32.totalorder %s46, %s47
    %p56 = scmp.eq.s32.totalorder %s15, 0
    %p57 = por %p55, %p56
    %p58 = scmp.ne.s32.totalorder %s46, %s47
    %p59 = scmp.eq.s32.totalorder %s16, 1
    %p60 = por %p58, %p59
    %p62 = scmp.ne.s32.totalorder %s47, %s61
    %p63 = scmp.eq.s32.totalorder %s16, 0
    %p64 = por %p62, %p63
    %s66 = sadd.s32 %s65, 1
    %p69 = scmp.eq.s32.totalorder %s10, 1
    %p70 = scmp.ne.s32.totalorder %s65, %s67
    %p71 = scmp.eq.s32.totalorder %s10, 0
    %p72 = por %p70, %p71
    %p73 = scmp.ne.s32.totalorder %s65, %s67
    %p74 = scmp.eq.s32.totalorder %s15, 1
    %p75 = por %p73, %p74
    %p76 = scmp.ne.s32.totalorder %s67, %s68
    %p77 = scmp.eq.s32.totalorder %s15, 0
    %p78 = por %p76, %p77
    %p79 = scmp.ne.s32.totalorder %s67, %s68
    %p80 = scmp.eq.s32.totalorder %s16, 1
    %p81 = por %p79, %p80
    %p83 = scmp.ne.s32.totalorder %s68, %s82
    %p84 = scmp.eq.s32.totalorder %s16, 0
    %p85 = por %p83, %p84
    %s87 = sadd.s32 %s86, 1
    %p90 = scmp.eq.s32.totalorder %s10, 1
    %p91 = scmp.ne.s32.totalorder %s86, %s88
    %p92 = scmp.eq.s32.totalorder %s10, 0
    %p93 = por %p91, %p92
    %p94 = scmp.ne.s32.totalorder %s86, %s88
    %p95 = scmp.eq.s32.totalorder %s15, 1
    %p96 = por %p94, %p95
    %p97 = scmp.ne.s32.totalorder %s88, %s89
    %p98 = scmp.eq.s32.totalorder %s15, 0
    %p99 = por %p97, %p98
    %p100 = scmp.ne.s32.totalorder %s88, %s89
    %p101 = scmp.eq.s32.totalorder %s16, 1
    %p102 = por %p100, %p101
    %p104 = scmp.ne.s32.totalorder %s89, %s103
    %p105 = scmp.eq.s32.totalorder %s16, 0
    %p106 = por %p104, %p105
    %s107 = ssub.s32 %s10, %s17
    %p108 = scmp.eq.s32.totalorder %s107, 0
    %s110 = sadd.s32 %s109, 1
    %s111 = scalar_select %p108, %s109, %s110
    %p114 = pneg %p108
    %p115 = scmp.eq.s32.totalorder %s10, 1
    %p116 = por %p114, %p115
    %p117 = scmp.ne.s32.totalorder %s109, %s112
    %p118 = scmp.eq.s32.totalorder %s10, 0
    %p119 = por %p117, %p118
    %p120 = scmp.ne.s32.totalorder %s109, %s112
    %p121 = scmp.eq.s32.totalorder %s15, 1
    %p122 = por %p120, %p121
    %p123 = scmp.ne.s32.totalorder %s112, %s113
    %p124 = scmp.eq.s32.totalorder %s15, 0
    %p125 = por %p123, %p124
    %p126 = scmp.ne.s32.totalorder %s112, %s113
    %p127 = scmp.eq.s32.totalorder %s16, 1
    %p128 = por %p126, %p127
    %p130 = scmp.ne.s32.totalorder %s113, %s129
    %p131 = scmp.eq.s32.totalorder %s16, 0
    %p132 = por %p130, %p131
    %p133 = scmp.le.s32.totalorder 1, %s10
    %p134 = scmp.lt.s32.totalorder %s10, 3
    %p135 = pnand %p133, %p134
    %p136 = pneg %p135
    // Predicated region
    $region9: #{adaptive_dilated_block.1} parent=5 // pred_check
      _
    $region10: #{adaptive_dilated_block.1} parent=5 // pred_check_branch
      %138 = sbr.rel (%p135) target = $region12
    $region11: #{adaptive_dilated_block.1} parent=5 // pred_region
      %s139 = ssub.s32 %s10, 1
      // Predicated region
      $region13: #{adaptive_dilated_block.1} parent=11 // pred_check
        %p140 = pneg %p57
      $region14: #{adaptive_dilated_block.1} parent=11 // pred_check_branch
        %142 = sbr.rel (%p140) target = $region16
      $region15: #{adaptive_dilated_block.1} parent=11 // pred_region
        _
      $region16: #{adaptive_dilated_block.1} parent=11 // pred_fallthru
        _
      // Predicated region
      $region17: #{adaptive_dilated_block.1} parent=11 // pred_check
        %p143 = pneg %p78
      $region18: #{adaptive_dilated_block.1} parent=11 // pred_check_branch
        %145 = sbr.rel (%p143) target = $region20
      $region19: #{adaptive_dilated_block.1} parent=11 // pred_region
        _
      $region20: #{adaptive_dilated_block.1} parent=11 // pred_fallthru
        _
      // Predicated region
      $region21: #{adaptive_dilated_block.1} parent=11 // pred_check
        %p146 = pneg %p99
      $region22: #{adaptive_dilated_block.1} parent=11 // pred_check_branch
        %148 = sbr.rel (%p146) target = $region24
      $region23: #{adaptive_dilated_block.1} parent=11 // pred_region
        _
      $region24: #{adaptive_dilated_block.1} parent=11 // pred_fallthru
        _
    $region12: #{adaptive_dilated_block.1} parent=5 // pred_fallthru
      _
    %p149 = scmp.lt.s32.totalorder %s10, 2
    // Predicated region
    $region25: #{adaptive_dilated_block.1} parent=5 // pred_check
      %p150 = pneg %p149
    $region26: #{adaptive_dilated_block.1} parent=5 // pred_check_branch
      %152 = sbr.rel (%p150) target = $region28
    $region27: #{adaptive_dilated_block.1} parent=5 // pred_region
      // Predicated region
      $region29: #{adaptive_dilated_block.1} parent=27 // pred_check
        %p153 = pneg %p30
      $region30: #{adaptive_dilated_block.1} parent=27 // pred_check_branch
        %155 = sbr.rel (%p153) target = $region32
      $region31: #{adaptive_dilated_block.1} parent=27 // pred_region
        %p156 = scmp.lt.s32.totalorder %s10, 1
        %s157 = scalar_select %p156, %s10, 1
        %s158 = smul.addr %s157, 2
        %s159 = smul.addr %s158, 8
        %s160 = scalar_lea.vmem %s0, %s159
      $region32: #{adaptive_dilated_block.1} parent=27 // pred_fallthru
        _
    $region28: #{adaptive_dilated_block.1} parent=5 // pred_fallthru
      _
    %p161 = scmp.le.s32.totalorder 1, %s10
    %p162 = scmp.lt.s32.totalorder %s10, 3
    %p163 = pnand %p161, %p162
    %p164 = pneg %p163
    // Predicated region
    $region33: #{adaptive_dilated_block.1} parent=5 // pred_check
      _
    $region34: #{adaptive_dilated_block.1} parent=5 // pred_check_branch
      %166 = sbr.rel (%p163) target = $region36
    $region35: #{adaptive_dilated_block.1} parent=5 // pred_region
      %s167 = ssub.s32 %s10, 1
      %p168 = scmp.lt.s32.totalorder %s15, 1
      %s169 = scalar_select %p168, %s15, 1
      %s170 = smul.addr %s169, 2
      %s171 = smul.addr %s170, 8
      %s172 = scalar_lea.vmem %s0, %s171
      %p173 = pneg %p36
      %p174 = pneg %p33
      %p175 = pneg %p57
      %p176 = pneg %p54
      %p177 = pneg %p78
      %p178 = pneg %p75
      %p179 = pneg %p99
      %p180 = pneg %p96
      %p181 = pneg %p125
      %p182 = pneg %p122
      %p183 = scmp.lt.s32.totalorder %s15, 1
      %s184 = scalar_select %p183, %s15, 1
      %s185 = smul.addr %s184, 2
      %s186 = smul.addr %s185, 8
      %s187 = scalar_lea.vmem %s4, %s186
      %p188 = scmp.lt.s32.totalorder %s15, 1
      %s189 = scalar_select %p188, %s15, 1
      %s190 = smul.addr %s189, 2
      %s191 = smul.addr %s190, 8
      %s192 = scalar_lea.vmem %s0, %s191
      %p193 = scmp.lt.s32.totalorder %s15, 1
      %s194 = scalar_select %p193, %s15, 1
      %s195 = smul.addr %s194, 2
      %s196 = smul.addr %s195, 8
      %s197 = scalar_lea.vmem %s4, %s196
      %v199 = vld [vmem:[%s192] sm:$0xff]
      %v200 = vld [vmem:[%s192 + $0x8] sm:$0xff]
      %vm203 = vcmask 1040384
      %v204 = vrot.slane %v199, 7
      %v205 = vrot.slane %v200, 7
      %v206 = vsel %vm203, %v204, %v205
      %v209 = vsel %vm203, 0.0, %v204
      %v210 = vpack.c.bf16 %v206, %v209
      %v211 = vld [vmem:[%s1] sm:$0xf]
      %v212 = vld [vmem:[%s1 + $0x4] sm:$0xf]
      %v213 = vld [vmem:[%s1 + $0x8] sm:$0xf]
      %v214 = vld [vmem:[%s1 + $0xc] sm:$0xf]
      %v215 = vld [vmem:[%s1 + $0x10] sm:$0xf]
      %v216 = vld [vmem:[%s1 + $0x14] sm:$0xf]
      %v217 = vld [vmem:[%s1 + $0x18] sm:$0xf]
      %v218 = vld [vmem:[%s1 + $0x1c] sm:$0xf]
      %v219 = vpack.c.bf16 %v200, %v199
      %s220 = scalar_lea.vmem %s1, 32
      %v221 = vld [vmem:[%s220] sm:$0xf]
      %v222 = vld [vmem:[%s220 + $0x4] sm:$0xf]
      %v223 = vld [vmem:[%s220 + $0x8] sm:$0xf]
      %v224 = vld [vmem:[%s220 + $0xc] sm:$0xf]
      %v225 = vld [vmem:[%s220 + $0x10] sm:$0xf]
      %v226 = vld [vmem:[%s220 + $0x14] sm:$0xf]
      %v227 = vld [vmem:[%s220 + $0x18] sm:$0xf]
      %v228 = vld [vmem:[%s220 + $0x1c] sm:$0xf]
      %v237 = vunpack.c.l.b16 %v221
      %v238 = vunpack.c.l.b16 %v222
      %v239 = vunpack.c.l.b16 %v223
      %v240 = vunpack.c.l.b16 %v224
      %v241 = vunpack.c.l.b16 %v225
      %v242 = vunpack.c.l.b16 %v226
      %v243 = vunpack.c.l.b16 %v227
      %v244 = vunpack.c.l.b16 %v228
      %v245 = vpack.c.b16 %v238, %v237
      %v246 = vpack.c.b16 %v240, %v239
      %v247 = vpack.c.b16 %v242, %v241
      %v248 = vpack.c.b16 %v244, %v243
      %vm253 = vcmask 523264
      %v255 = vsel %vm253, %v219, 0
      %257 = vmatpush.bf16.msra.mxu0 0
      %258 = vmatpush.bf16.msra.mxu0 0
      %259 = vmatpush.bf16.msra.mxu0 0
      %260 = vmatpush.bf16.msra.mxu0 0
      %261 = vmatpush.bf16.msra.mxu0 %v248
      %262 = vmatpush.bf16.msra.mxu0 %v247
      %263 = vmatpush.bf16.msra.mxu0 %v246
      %264 = vmatpush.bf16.msra.mxu0 %v245
      %265 = vmatmul.bf16.gmra.mxu0 %v255
      %v266 = vpop.f32.mrf.mxu0
      %v267 = vadd.f32 0.0, %v266
      %v268 = vpop.f32.mrf.mxu0
      %v269 = vadd.f32 0.0, %v268
      %270 = vdwg.mxu0
      %v279 = vunpack.c.l.b16 %v211
      %v280 = vunpack.c.l.b16 %v212
      %v281 = vunpack.c.l.b16 %v213
      %v282 = vunpack.c.l.b16 %v214
      %v283 = vunpack.c.l.b16 %v215
      %v284 = vunpack.c.l.b16 %v216
      %v285 = vunpack.c.l.b16 %v217
      %v286 = vunpack.c.l.b16 %v218
      %v287 = vpack.c.b16 %v280, %v279
      %v288 = vpack.c.b16 %v282, %v281
      %v289 = vpack.c.b16 %v284, %v283
      %v290 = vpack.c.b16 %v286, %v285
      %v296 = vsel %vm253, %v210, 0
      %298 = vmatpush.bf16.msra.mxu0 0
      %299 = vmatpush.bf16.msra.mxu0 0
      %300 = vmatpush.bf16.msra.mxu0 0
      %301 = vmatpush.bf16.msra.mxu0 0
      %302 = vmatpush.bf16.msra.mxu0 %v290
      %303 = vmatpush.bf16.msra.mxu0 %v289
      %304 = vmatpush.bf16.msra.mxu0 %v288
      %305 = vmatpush.bf16.msra.mxu0 %v287
      %306 = vmatmul.bf16.gmra.mxu0 %v296
      %v307 = vpop.f32.mrf.mxu0
      %v308 = vadd.f32 %v267, %v307
      %v309 = vpop.f32.mrf.mxu0
      %v310 = vadd.f32 %v269, %v309
      %311 = vdwg.mxu0
      %vm312 = vcmask 1046528
      %v313 = vrot.slane %v199, 1
      %v314 = vrot.slane %v200, 1
      %v315 = vsel %vm312, %v313, %v314
      %v318 = vsel %vm312, %v314, 0.0
      %v319 = vpack.c.bf16 %v318, %v315
      %s320 = scalar_lea.vmem %s1, 64
      %v321 = vld [vmem:[%s320] sm:$0xf]
      %v322 = vld [vmem:[%s320 + $0x4] sm:$0xf]
      %v323 = vld [vmem:[%s320 + $0x8] sm:$0xf]
      %v324 = vld [vmem:[%s320 + $0xc] sm:$0xf]
      %v325 = vld [vmem:[%s320 + $0x10] sm:$0xf]
      %v326 = vld [vmem:[%s320 + $0x14] sm:$0xf]
      %v327 = vld [vmem:[%s320 + $0x18] sm:$0xf]
      %v328 = vld [vmem:[%s320 + $0x1c] sm:$0xf]
      %v337 = vunpack.c.l.b16 %v321
      %v338 = vunpack.c.l.b16 %v322
      %v339 = vunpack.c.l.b16 %v323
      %v340 = vunpack.c.l.b16 %v324
      %v341 = vunpack.c.l.b16 %v325
      %v342 = vunpack.c.l.b16 %v326
      %v343 = vunpack.c.l.b16 %v327
      %v344 = vunpack.c.l.b16 %v328
      %v345 = vpack.c.b16 %v338, %v337
      %v346 = vpack.c.b16 %v340, %v339
      %v347 = vpack.c.b16 %v342, %v341
      %v348 = vpack.c.b16 %v344, %v343
      %v354 = vsel %vm253, %v319, 0
      %356 = vmatpush.bf16.msra.mxu0 0
      %357 = vmatpush.bf16.msra.mxu0 0
      %358 = vmatpush.bf16.msra.mxu0 0
      %359 = vmatpush.bf16.msra.mxu0 0
      %360 = vmatpush.bf16.msra.mxu0 %v348
      %361 = vmatpush.bf16.msra.mxu0 %v347
      %362 = vmatpush.bf16.msra.mxu0 %v346
      %363 = vmatpush.bf16.msra.mxu0 %v345
      %364 = vmatmul.bf16.gmra.mxu0 %v354
      %v365 = vpop.f32.mrf.mxu0
      %v366 = vadd.f32 0.0, %v365
      %v367 = vpop.f32.mrf.mxu0
      %v368 = vadd.f32 0.0, %v367
      %369 = vdwg.mxu0
      %v370 = vadd.f32 %v308, %v366
      %v371 = vadd.f32 %v310, %v368
      %vm372 = vcmp.gt.f32.partialorder %v370, 0.0
      %vm373 = vcmp.gt.f32.partialorder %v371, 0.0
      %v374 = vmul.f32 %v370, 0.2
      %v375 = vmul.f32 %v371, 0.2
      %v376 = vsel %vm372, %v370, %v374
      %v377 = vsel %vm373, %v371, %v375
      %v380 = vrot.slane %v376, 7
      %v381 = vrot.slane %v377, 7
      %v382 = vsel %vm203, %v380, %v381
      %v385 = vsel %vm203, 0.0, %v380
      %v386 = vpack.c.bf16 %v382, %v385
      %v387 = vld [vmem:[%s2] sm:$0xf]
      %v388 = vld [vmem:[%s2 + $0x4] sm:$0xf]
      %v389 = vld [vmem:[%s2 + $0x8] sm:$0xf]
      %v390 = vld [vmem:[%s2 + $0xc] sm:$0xf]
      %v391 = vld [vmem:[%s2 + $0x10] sm:$0xf]
      %v392 = vld [vmem:[%s2 + $0x14] sm:$0xf]
      %v393 = vld [vmem:[%s2 + $0x18] sm:$0xf]
      %v394 = vld [vmem:[%s2 + $0x1c] sm:$0xf]
      %v395 = vpack.c.bf16 %v377, %v376
      %s396 = scalar_lea.vmem %s2, 32
      %v397 = vld [vmem:[%s396] sm:$0xf]
      %v398 = vld [vmem:[%s396 + $0x4] sm:$0xf]
      %v399 = vld [vmem:[%s396 + $0x8] sm:$0xf]
      %v400 = vld [vmem:[%s396 + $0xc] sm:$0xf]
      %v401 = vld [vmem:[%s396 + $0x10] sm:$0xf]
      %v402 = vld [vmem:[%s396 + $0x14] sm:$0xf]
      %v403 = vld [vmem:[%s396 + $0x18] sm:$0xf]
      %v404 = vld [vmem:[%s396 + $0x1c] sm:$0xf]
      %v413 = vunpack.c.l.b16 %v397
      %v414 = vunpack.c.l.b16 %v398
      %v415 = vunpack.c.l.b16 %v399
      %v416 = vunpack.c.l.b16 %v400
      %v417 = vunpack.c.l.b16 %v401
      %v418 = vunpack.c.l.b16 %v402
      %v419 = vunpack.c.l.b16 %v403
      %v420 = vunpack.c.l.b16 %v404
      %v421 = vpack.c.b16 %v414, %v413
      %v422 = vpack.c.b16 %v416, %v415
      %v423 = vpack.c.b16 %v418, %v417
      %v424 = vpack.c.b16 %v420, %v419
      %v430 = vsel %vm253, %v395, 0
      %432 = vmatpush.bf16.msra.mxu0 0
      %433 = vmatpush.bf16.msra.mxu0 0
      %434 = vmatpush.bf16.msra.mxu0 0
      %435 = vmatpush.bf16.msra.mxu0 0
      %436 = vmatpush.bf16.msra.mxu0 %v424
      %437 = vmatpush.bf16.msra.mxu0 %v423
      %438 = vmatpush.bf16.msra.mxu0 %v422
      %439 = vmatpush.bf16.msra.mxu0 %v421
      %440 = vmatmul.bf16.gmra.mxu0 %v430
      %v441 = vpop.f32.mrf.mxu0
      %v442 = vadd.f32 0.0, %v441
      %v443 = vpop.f32.mrf.mxu0
      %v444 = vadd.f32 0.0, %v443
      %445 = vdwg.mxu0
      %v454 = vunpack.c.l.b16 %v387
      %v455 = vunpack.c.l.b16 %v388
      %v456 = vunpack.c.l.b16 %v389
      %v457 = vunpack.c.l.b16 %v390
      %v458 = vunpack.c.l.b16 %v391
      %v459 = vunpack.c.l.b16 %v392
      %v460 = vunpack.c.l.b16 %v393
      %v461 = vunpack.c.l.b16 %v394
      %v462 = vpack.c.b16 %v455, %v454
      %v463 = vpack.c.b16 %v457, %v456
      %v464 = vpack.c.b16 %v459, %v458
      %v465 = vpack.c.b16 %v461, %v460
      %v471 = vsel %vm253, %v386, 0
      %473 = vmatpush.bf16.msra.mxu0 0
      %474 = vmatpush.bf16.msra.mxu0 0
      %475 = vmatpush.bf16.msra.mxu0 0
      %476 = vmatpush.bf16.msra.mxu0 0
      %477 = vmatpush.bf16.msra.mxu0 %v465
      %478 = vmatpush.bf16.msra.mxu0 %v464
      %479 = vmatpush.bf16.msra.mxu0 %v463
      %480 = vmatpush.bf16.msra.mxu0 %v462
      %481 = vmatmul.bf16.gmra.mxu0 %v471
      %v482 = vpop.f32.mrf.mxu0
      %v483 = vadd.f32 %v442, %v482
      %v484 = vpop.f32.mrf.mxu0
      %v485 = vadd.f32 %v444, %v484
      %486 = vdwg.mxu0
      %v487 = vrot.slane %v376, 1
      %v488 = vrot.slane %v377, 1
      %v489 = vsel %vm312, %v487, %v488
      %v492 = vsel %vm312, %v488, 0.0
      %v493 = vpack.c.bf16 %v492, %v489
      %s494 = scalar_lea.vmem %s2, 64
      %v495 = vld [vmem:[%s494] sm:$0xf]
      %v496 = vld [vmem:[%s494 + $0x4] sm:$0xf]
      %v497 = vld [vmem:[%s494 + $0x8] sm:$0xf]
      %v498 = vld [vmem:[%s494 + $0xc] sm:$0xf]
      %v499 = vld [vmem:[%s494 + $0x10] sm:$0xf]
      %v500 = vld [vmem:[%s494 + $0x14] sm:$0xf]
      %v501 = vld [vmem:[%s494 + $0x18] sm:$0xf]
      %v502 = vld [vmem:[%s494 + $0x1c] sm:$0xf]
      %v511 = vunpack.c.l.b16 %v495
      %v512 = vunpack.c.l.b16 %v496
      %v513 = vunpack.c.l.b16 %v497
      %v514 = vunpack.c.l.b16 %v498
      %v515 = vunpack.c.l.b16 %v499
      %v516 = vunpack.c.l.b16 %v500
      %v517 = vunpack.c.l.b16 %v501
      %v518 = vunpack.c.l.b16 %v502
      %v519 = vpack.c.b16 %v512, %v511
      %v520 = vpack.c.b16 %v514, %v513
      %v521 = vpack.c.b16 %v516, %v515
      %v522 = vpack.c.b16 %v518, %v517
      %v528 = vsel %vm253, %v493, 0
      %530 = vmatpush.bf16.msra.mxu0 0
      %531 = vmatpush.bf16.msra.mxu0 0
      %532 = vmatpush.bf16.msra.mxu0 0
      %533 = vmatpush.bf16.msra.mxu0 0
      %534 = vmatpush.bf16.msra.mxu0 %v522
      %535 = vmatpush.bf16.msra.mxu0 %v521
      %536 = vmatpush.bf16.msra.mxu0 %v520
      %537 = vmatpush.bf16.msra.mxu0 %v519
      %538 = vmatmul.bf16.gmra.mxu0 %v528
      %v539 = vpop.f32.mrf.mxu0
      %v540 = vadd.f32 0.0, %v539
      %v541 = vpop.f32.mrf.mxu0
      %v542 = vadd.f32 0.0, %v541
      %543 = vdwg.mxu0
      %v544 = vadd.f32 %v483, %v540
      %v545 = vadd.f32 %v485, %v542
      %v546 = vld [vmem:[%s3] sm:$0x1]
      %v548 = vperm.slane %v546, 0
      %v550 = vadd.f32 %v544, %v548
      %v551 = vadd.f32 %v545, %v548
      %v552 = vadd.f32 %v550, %v199
      %v553 = vadd.f32 %v551, %v200
      %554 = vst.msk [vmem:[%s197] sm:$0xff] %vm253, %v552
      %555 = vst.msk [vmem:[%s197 + $0x8] sm:$0xff] %vm253, %v553
      %p556 = scmp.lt.s32.totalorder %s15, 1
      %s557 = scalar_select %p556, %s15, 1
      %s558 = smul.addr %s557, 2
      %s559 = smul.addr %s558, 8
      %s560 = scalar_lea.vmem %s4, %s559
      // Predicated region
      $region37: #{adaptive_dilated_block.1} parent=35 // pred_check
        %p561 = pneg %p122
      $region38: #{adaptive_dilated_block.1} parent=35 // pred_check_branch
        %563 = sbr.rel (%p561) target = $region40
      $region39: #{adaptive_dilated_block.1} parent=35 // pred_region
        _
      $region40: #{adaptive_dilated_block.1} parent=35 // pred_fallthru
        _
    $region36: #{adaptive_dilated_block.1} parent=5 // pred_fallthru
      _
    %p564 = scmp.le.s32.totalorder 2, %s10
    // Predicated region
    $region41: #{adaptive_dilated_block.1} parent=5 // pred_check
      %p565 = pneg %p564
    $region42: #{adaptive_dilated_block.1} parent=5 // pred_check_branch
      %567 = sbr.rel (%p565) target = $region44
    $region43: #{adaptive_dilated_block.1} parent=5 // pred_region
      %s568 = ssub.s32 %s10, 2
      // Predicated region
      $region45: #{adaptive_dilated_block.1} parent=43 // pred_check
        %p569 = pneg %p128
      $region46: #{adaptive_dilated_block.1} parent=43 // pred_check_branch
        %571 = sbr.rel (%p569) target = $region48
      $region47: #{adaptive_dilated_block.1} parent=43 // pred_region
        %p572 = scmp.lt.s32.totalorder %s16, 1
        %s573 = scalar_select %p572, %s16, 1
        %s574 = smul.addr %s573, 2
        %s575 = smul.addr %s574, 8
        %s576 = scalar_lea.vmem %s4, %s575
      $region48: #{adaptive_dilated_block.1} parent=43 // pred_fallthru
        _
    $region44: #{adaptive_dilated_block.1} parent=5 // pred_fallthru
      _
  $region6: #{adaptive_dilated_block.1} parent=0 // loop_footer
    %s14 = sadd.s32 1, %s10
  $region7: #{adaptive_dilated_block.1} parent=0 // loop_footer_branch
    %9 = sbr.rel target = $region3
  $region8: #{adaptive_dilated_block.1} parent=0 // loop_exit
    _

</llo_original>
